<compile_context>
chip_gen: v7x
topology: tpu7x:2x2x1
jax: 0.10.0
libtpu: 0.0.40
codegen_flags: <defaults>
</compile_context>

<pallas_src>
import jax
import jax.numpy as jnp
from jax import lax
from jax.experimental import pallas as pl
from jax.experimental.pallas import tpu as pltpu


# --------------------------- kernel 1: edge loop ------------------------------
def gn_edge_kernel(
        # scalar-prefetched indices (SMEM, full padded arrays)
        rol_sp, col_sp,
        # per-edge-tile inputs
        rol_ref, edge_ref,
        # resident gather table [N, nc+gc] = concat(node, g[batch]) in f32
        table_ref,
        # edge_feature_mlp (layer-1 weights pre-split/stacked) + output_edge_mlp
        we1_rg, we1_c, we1_e, be1, we2, be2, woe, boe,
        # outputs
        edge_out, scat_out,
        # scratch: gathered row buffers
        grol_sc, gcol_sc):
    f32, bf16 = jnp.float32, jnp.bfloat16
    i = pl.program_id(0)
    tE = rol_ref.shape[0]
    N = table_ref.shape[0]
    base = i * tE

    def mm(a, b):
        return jnp.dot(a, b, preferred_element_type=f32)

    # ---- init the resident scatter accumulator output on the first tile ----
    @pl.when(i == 0)
    def _():
        scat_out[...] = jnp.zeros_like(scat_out)

    # ---- index-based row gathers (no [tE, N] one-hot, no gather matmuls) ----
    # Padded edges carry sentinel index N; clamp for the gather (their features
    # are never used: zero scatter row, edge_out rows sliced off outside).
    def gather_body(e, carry):
        r = jnp.minimum(rol_sp[base + e], N - 1)
        c = jnp.minimum(col_sp[base + e], N - 1)
        grol_sc[pl.ds(e, 1), :] = table_ref[pl.ds(r, 1), :]
        gcol_sc[pl.ds(e, 1), :] = table_ref[pl.ds(c, 1), :]
        return carry
    lax.fori_loop(0, tE, gather_body, 0, unroll=False)

    # ---- edge_feature_mlp (split-weight partial matmuls, no concat) ----
    # grol rows = [node[rol], g[batch[rol]]], gcol rows = [node[col], g[batch[col]]]
    # (we1_c is zero-padded over the g columns so the col-side g part is ignored)
    h = (mm(grol_sc[...].astype(bf16), we1_rg[...])
         + mm(gcol_sc[...].astype(bf16), we1_c[...])
         + mm(edge_ref[...], we1_e[...])
         + be1[...])
    h = jnp.maximum(h, 0.0)
    edge_feat = mm(h.astype(bf16), we2[...]) + be2[...]          # [tE, mid] f32

    # ---- scatter_('add', edge_feat, rol): exact f32 one-hot matmul ----
    iota_en = lax.broadcasted_iota(jnp.int32, (tE, N), 1)
    rol_oh = (rol_ref[...] == iota_en).astype(f32)               # [tE, N]
    scat_out[...] += lax.dot_general(rol_oh, edge_feat,
                                     (((0,), (0,)), ((), ())),
                                     preferred_element_type=f32)  # [N, mid]

    # ---- output_edge_mlp (bf16 lane-dense padded output) ----
    edge_out[...] = (mm(edge_feat.astype(bf16), woe[...])
                     + boe[...]).astype(edge_out.dtype)


# ------------------------ kernel 2: node / global finalize --------------------
def gn_finalize_kernel(node_ref, gnode_ref, g_ref, batch_ref, scat_ref,
                       wn1_n, wn1_s, wn1_g, bn1, wn2, bn2,
                       wg1_n, wg1_e, wg1_g, bg1, wg2, bg2,
                       node_out, g_out):
    f32, bf16 = jnp.float32, jnp.bfloat16
    N = node_ref.shape[0]
    B = g_ref.shape[0]

    def mm(a, b):
        return jnp.dot(a, b, preferred_element_type=f32)

    def contract0(a, b):
        # a:[K, M], b:[K, P] -> [M, P] (== a.T @ b, transpose folded into MXU)
        return lax.dot_general(a, b, (((0,), (0,)), ((), ())),
                               preferred_element_type=f32)

    scat = scat_ref[...]                                          # [N, mid] f32

    # node_mlp on concat([node, scat_e, g[batch]]) via split weights
    hn = (mm(node_ref[...], wn1_n[...])
          + mm(scat.astype(bf16), wn1_s[...])
          + mm(gnode_ref[...], wn1_g[...])
          + bn1[...])
    hn = jnp.maximum(hn, 0.0)
    node_new = mm(hn.astype(bf16), wn2[...]) + bn2[...]           # [N, out_node_p]
    node_out[...] = node_new.astype(node_out.dtype)

    # global_mlp on concat([segsum(node_new, batch), segsum(edge_feat, batch[rol]), g])
    iota_nb = lax.broadcasted_iota(jnp.int32, (N, B), 1)
    batch_oh = (batch_ref[...] == iota_nb).astype(f32)            # [N, B] exact
    scat_n = contract0(batch_oh, node_new)                        # [B, out_node_p]
    scat_eg = contract0(batch_oh, scat)                           # [B, mid]
    hg = (mm(scat_n.astype(bf16), wg1_n[...])
          + mm(scat_eg.astype(bf16), wg1_e[...])
          + mm(g_ref[...], wg1_g[...])
          + bg1[...])
    hg = jnp.maximum(hg, 0.0)
    g_out[...] = (mm(hg.astype(bf16), wg2[...]) + bg2[...]).astype(g_out.dtype)


# ----------------------------- wrapper ---------------------------------------
def gn_block_pallas(node, edge, g, rol, col, batch, params,
                    out_node_c, out_edge_c, out_global_c, *, edge_tile=512):
    (we1, be1, we2, be2, wn1, bn1, wn2, bn2,
     wg1, bg1, wg2, bg2, woe, boe) = params

    N, nc = node.shape
    E, ec = edge.shape
    B, gc = g.shape
    mid = we2.shape[0]
    LANE = 128
    bf = jnp.bfloat16

    # The module's own forward concatenates segment_sum(edge_feat) (width mid)
    # where global_mlp expects out_edge_channels columns.
    assert out_edge_c == mid, (
        "GNBlock.forward requires out_edge_channels == mid_channels "
        f"(got {out_edge_c} vs {mid})")

    def rup(x, m):
        return (x + m - 1) // m * m

    # Edge-tile size: multiple of 16 (bf16 sublane packing of the edge tiles).
    tE = max(16, min(rup(edge_tile, 16), rup(E, 16)))
    E_pad = rup(E, tE)
    num_tiles = E_pad // tE
    pad_e = E_pad - E

    # Padded edges use sentinel index N: all-zero scatter one-hot row; the
    # gather clamps to N-1 so no out-of-bounds reads (values discarded anyway).
    edge_bf = jnp.pad(edge, ((0, pad_e), (0, 0))).astype(bf)
    rol_p = jnp.pad(rol.astype(jnp.int32), (0, pad_e), constant_values=N)
    col_p = jnp.pad(col.astype(jnp.int32), (0, pad_e), constant_values=N)
    rol_v = rol_p.reshape(E_pad, 1)                 # for the scatter one-hot
    batch_i = batch.astype(jnp.int32)
    batch_c = batch_i.reshape(N, 1)

    # g[batch] gathered once in the wrapper (plain XLA gather); fuse into the
    # f32 gather table so one row read yields [node[i], g[batch[i]]].
    g_node = g[batch_i]                                           # [N, gc] f32
    table_rg = jnp.concatenate([node, g_node], axis=1)            # [N, nc+gc] f32

    # ---- split / stack layer-1 weights by concat block; cast weights to bf16 ----
    # edge_feature_mlp input order: [node[rol], node[col], edge, g[batch[rol]]]
    we1_r = we1[:nc]
    we1_c = we1[nc:2 * nc]
    we1_e = we1[2 * nc:2 * nc + ec]
    we1_g = we1[2 * nc + ec:]
    we1_rg = jnp.concatenate([we1_r, we1_g], axis=0).astype(bf)   # [nc+gc, mid]
    we1_cp = jnp.concatenate(                                      # zero g-rows
        [we1_c, jnp.zeros((gc, mid), we1.dtype)], axis=0).astype(bf)
    # node_mlp input order: [node, scat_e, g[batch]]
    wn1_n = wn1[:nc].astype(bf)
    wn1_s = wn1[nc:nc + mid].astype(bf)
    wn1_g = wn1[nc + mid:].astype(bf)

    # ---- lane-dense outputs: pad output feature dims to multiples of 128 ----
    out_node_p = rup(out_node_c, LANE)
    out_edge_p = rup(out_edge_c, LANE)
    out_glob_p = rup(out_global_c, LANE)

    def pad_cols(w, b, width):
        return (jnp.pad(w, ((0, 0), (0, width - w.shape[1]))),
                jnp.pad(b, ((0, 0), (0, width - b.shape[1]))))

    wn2_p, bn2_p = pad_cols(wn2, bn2, out_node_p)
    woe_p, boe_p = pad_cols(woe, boe, out_edge_p)
    wg2_p, bg2_p = pad_cols(wg2, bg2, out_glob_p)

    # global_mlp input order: [scat_n (padded to out_node_p), scat_eg, g]
    wg1_n = jnp.pad(wg1[:out_node_c],
                    ((0, out_node_p - out_node_c), (0, 0))).astype(bf)
    wg1_e = wg1[out_node_c:out_node_c + out_edge_c].astype(bf)
    wg1_g = wg1[out_node_c + out_edge_c:].astype(bf)

    # ---- generation-aware VMEM limit (~75% of physical, capped at 100 MiB) ----
    try:
        vmem_cap = pltpu.get_tpu_info().vmem_capacity_bytes
    except Exception:
        vmem_cap = 64 * 1024 * 1024
    vmem_limit = int(min(vmem_cap * 3 // 4, 100 * 1024 * 1024))

    # ============================ edge kernel =================================
    edge_inputs = [
        rol_v, edge_bf, table_rg,
        we1_rg, we1_cp, we1_e.astype(bf), be1, we2.astype(bf), be2,
        woe_p.astype(bf), boe_p,
    ]
    edge_in_specs = [
        pl.BlockSpec((tE, 1), lambda i, *_: (i, 0)),       # rol tile (one-hot)
        pl.BlockSpec((tE, ec), lambda i, *_: (i, 0)),      # edge tile (bf16)
    ] + [pl.BlockSpec(x.shape, lambda i, *_: (0, 0)) for x in edge_inputs[2:]]

    edge_out_shapes = (
        jax.ShapeDtypeStruct((E_pad, out_edge_p), bf),     # per-tile edge out
        jax.ShapeDtypeStruct((N, mid), jnp.float32),       # scatter accumulator
    )
    edge_out_specs = (
        pl.BlockSpec((tE, out_edge_p), lambda i, *_: (i, 0)),
        pl.BlockSpec((N, mid), lambda i, *_: (0, 0)),      # resident accumulator
    )

    grid_spec = pltpu.PrefetchScalarGridSpec(
        num_scalar_prefetch=2,                             # rol_p, col_p -> SMEM
        grid=(num_tiles,),
        in_specs=edge_in_specs,
        out_specs=edge_out_specs,
        scratch_shapes=[
            pltpu.VMEM((tE, nc + gc), jnp.float32),        # gathered rol rows
            pltpu.VMEM((tE, nc + gc), jnp.float32),        # gathered col rows
        ],
    )

    edge_o, scat = pl.pallas_call(
        gn_edge_kernel,
        out_shape=edge_out_shapes,
        grid_spec=grid_spec,
        compiler_params=pltpu.CompilerParams(
            dimension_semantics=("arbitrary",),            # reduction into scat
            vmem_limit_bytes=vmem_limit),
    )(rol_p, col_p, *edge_inputs)

    # ========================= node / global finalize =========================
    fin_inputs = [
        node.astype(bf), g_node.astype(bf), g.astype(bf), batch_c, scat,
        wn1_n, wn1_s, wn1_g, bn1, wn2_p.astype(bf), bn2_p,
        wg1_n, wg1_e, wg1_g, bg1, wg2_p.astype(bf), bg2_p,
    ]
    fin_in_specs = [pl.BlockSpec(x.shape, lambda i: (0, 0)) for x in fin_inputs]
    fin_out_shapes = (
        jax.ShapeDtypeStruct((N, out_node_p), jnp.float32),
        jax.ShapeDtypeStruct((B, out_glob_p), jnp.float32),
    )
    fin_out_specs = (
        pl.BlockSpec((N, out_node_p), lambda i: (0, 0)),
        pl.BlockSpec((B, out_glob_p), lambda i: (0, 0)),
    )

    node_o, g_o = pl.pallas_call(
        gn_finalize_kernel,
        out_shape=fin_out_shapes,
        grid=(1,),
        in_specs=fin_in_specs,
        out_specs=fin_out_specs,
        compiler_params=pltpu.CompilerParams(
            dimension_semantics=("arbitrary",),
            vmem_limit_bytes=vmem_limit),
    )(*fin_inputs)

    return (node_o[:, :out_node_c],
            edge_o[:E, :out_edge_c].astype(jnp.float32),
            g_o[:, :out_global_c])


# ----------------------------- parameter init --------------------------------
def _linear_params(key, in_dim, out_dim):
    kw, kb = jax.random.split(key)
    bound = 1.0 / jnp.sqrt(in_dim)
    w = jax.random.uniform(kw, (in_dim, out_dim), jnp.float32, -bound, bound)
    b = jax.random.uniform(kb, (1, out_dim), jnp.float32, -bound, bound)
    return w, b


def init_gn_params(key, nc, ec, gc, mid, out_node, out_edge, out_global):
    keys = jax.random.split(key, 7)
    # edge_feature_mlp: (2*nc + ec + gc) -> mid -> mid     (layers=2)
    we1, be1 = _linear_params(keys[0], 2 * nc + ec + gc, mid)
    we2, be2 = _linear_params(keys[1], mid, mid)
    # node_mlp: (nc + mid + gc) -> mid -> out_node
    wn1, bn1 = _linear_params(keys[2], nc + mid + gc, mid)
    wn2, bn2 = _linear_params(keys[3], mid, out_node)
    # global_mlp: (out_node + out_edge + gc) -> mid -> out_global
    wg1, bg1 = _linear_params(keys[4], out_node + out_edge + gc, mid)
    wg2, bg2 = _linear_params(keys[5], mid, out_global)
    # output_edge_mlp: mid -> out_edge (single fc)
    woe, boe = _linear_params(keys[6], mid, out_edge)
    return [we1, be1, we2, be2, wn1, bn1, wn2, bn2,
            wg1, bg1, wg2, bg2, woe, boe]


# ----------------------------- pure-JAX reference ----------------------------
def gn_block_ref(node, edge, g, rol, col, batch, params, N, B):
    (we1, be1, we2, be2, wn1, bn1, wn2, bn2,
     wg1, bg1, wg2, bg2, woe, boe) = params
    relu = jax.nn.relu
    edge_inp = jnp.concatenate([node[rol], node[col], edge, g[batch[rol]]], axis=1)
    edge_feat = relu(edge_inp @ we1 + be1) @ we2 + be2
    scat_e = jax.ops.segment_sum(edge_feat, rol, num_segments=N)
    node_inp = jnp.concatenate([node, scat_e, g[batch]], axis=1)
    node_new = relu(node_inp @ wn1 + bn1) @ wn2 + bn2
    scat_n = jax.ops.segment_sum(node_new, batch, num_segments=B)
    scat_eg = jax.ops.segment_sum(edge_feat, batch[rol], num_segments=B)
    g_new = relu(jnp.concatenate([scat_n, scat_eg, g], axis=1) @ wg1 + bg1) @ wg2 + bg2
    edge_final = edge_feat @ woe + boe
    return node_new, edge_final, g_new


# ----------------------------- main -------------------------------------------
if __name__ == "__main__":
    # Small graph: N nodes, E edges, B graphs in the batch.
    N, E, B = 16, 40, 2
    nc, ec, gc = 8, 8, 4          # in_channels = (node, edge, global)
    mid = 32                      # mid_channels (layers=2)
    out_node, out_edge, out_global = 16, 32, 8   # out_edge == mid (required by
                                                 # the module's own forward)

    key = jax.random.PRNGKey(0)
    k_node, k_edge, k_g, k_rol, k_col, k_params = jax.random.split(key, 6)

    node = jax.random.normal(k_node, (N, nc), jnp.float32)
    edge = jax.random.normal(k_edge, (E, ec), jnp.float32)
    g = jax.random.normal(k_g, (B, gc), jnp.float32)

    # batch: first half of nodes -> graph 0, second half -> graph 1.
    batch = jnp.concatenate([jnp.zeros(N // 2, jnp.int32),
                             jnp.ones(N - N // 2, jnp.int32)])
    # edges stay within their graph
    rol0 = jax.random.randint(k_rol, (E // 2,), 0, N // 2)
    rol1 = jax.random.randint(jax.random.fold_in(k_rol, 1), (E - E // 2,), N // 2, N)
    col0 = jax.random.randint(k_col, (E // 2,), 0, N // 2)
    col1 = jax.random.randint(jax.random.fold_in(k_col, 1), (E - E // 2,), N // 2, N)
    rol = jnp.concatenate([rol0, rol1]).astype(jnp.int32)
    col = jnp.concatenate([col0, col1]).astype(jnp.int32)

    params = init_gn_params(k_params, nc, ec, gc, mid, out_node, out_edge, out_global)

    # edge_tile=16 -> 3 edge tiles (exercises tiling + edge padding + clamping).
    node_out, edge_out, g_out = gn_block_pallas(
        node, edge, g, rol, col, batch, params,
        out_node, out_edge, out_global, edge_tile=16)
    jax.block_until_ready((node_out, edge_out, g_out))

    # correctness check against a pure-f32 JAX reference (kernel uses bf16 MXU
    # operands with f32 accumulation and a bf16 edge output, hence the relaxed
    # tolerance)
    node_ref, edge_ref, g_ref = gn_block_ref(node, edge, g, rol, col, batch, params, N, B)
    assert jnp.allclose(node_out, node_ref, rtol=2e-2, atol=2e-2), "node mismatch"
    assert jnp.allclose(edge_out, edge_ref, rtol=2e-2, atol=2e-2), "edge mismatch"
    assert jnp.allclose(g_out, g_ref, rtol=2e-2, atol=2e-2), "global mismatch"

    print("KERNEL_OK")
</pallas_src>

<mosaic_0001>
module attributes {stable_mosaic.version = 11 : i64} {
  func.func @gn_edge_kernel(%arg0: i32, %arg1: memref<48xi32, #tpu.memory_space<smem>>, %arg2: memref<48xi32, #tpu.memory_space<smem>>, %arg3: memref<16x1xi32, #tpu.memory_space<vmem>>, %arg4: memref<16x8xbf16, #tpu.memory_space<vmem>>, %arg5: memref<16x12xf32, #tpu.memory_space<vmem>>, %arg6: memref<12x32xbf16, #tpu.memory_space<vmem>>, %arg7: memref<12x32xbf16, #tpu.memory_space<vmem>>, %arg8: memref<8x32xbf16, #tpu.memory_space<vmem>>, %arg9: memref<1x32xf32, #tpu.memory_space<vmem>>, %arg10: memref<32x32xbf16, #tpu.memory_space<vmem>>, %arg11: memref<1x32xf32, #tpu.memory_space<vmem>>, %arg12: memref<32x128xbf16, #tpu.memory_space<vmem>>, %arg13: memref<1x128xf32, #tpu.memory_space<vmem>>, %arg14: memref<16x128xbf16, #tpu.memory_space<vmem>>, %arg15: memref<16x32xf32, #tpu.memory_space<vmem>>, %arg16: memref<16x12xf32, #tpu.memory_space<vmem>>, %arg17: memref<16x12xf32, #tpu.memory_space<vmem>>) attributes {dimension_semantics = [#tpu.dimension_semantics<arbitrary>], iteration_bounds = array<i64: 3>, scalar_prefetch = 2 : i64, scratch_operands = 2 : i64, tpu.core_type = #tpu.core_type<tc>, window_params = [{transform_indices = @transform_0, window_bounds = array<i64: 16, 1>}, {transform_indices = @transform_1, window_bounds = array<i64: 16, 8>}, {pipeline_mode = #tpu.pipeline_mode<synchronous>, transform_indices = @transform_2, window_bounds = array<i64: 16, 12>}, {pipeline_mode = #tpu.pipeline_mode<synchronous>, transform_indices = @transform_3, window_bounds = array<i64: 12, 32>}, {pipeline_mode = #tpu.pipeline_mode<synchronous>, transform_indices = @transform_4, window_bounds = array<i64: 12, 32>}, {pipeline_mode = #tpu.pipeline_mode<synchronous>, transform_indices = @transform_5, window_bounds = array<i64: 8, 32>}, {pipeline_mode = #tpu.pipeline_mode<synchronous>, transform_indices = @transform_6, window_bounds = array<i64: 1, 32>}, {pipeline_mode = #tpu.pipeline_mode<synchronous>, transform_indices = @transform_7, window_bounds = array<i64: 32, 32>}, {pipeline_mode = #tpu.pipeline_mode<synchronous>, transform_indices = @transform_8, window_bounds = array<i64: 1, 32>}, {pipeline_mode = #tpu.pipeline_mode<synchronous>, transform_indices = @transform_9, window_bounds = array<i64: 32, 128>}, {pipeline_mode = #tpu.pipeline_mode<synchronous>, transform_indices = @transform_10, window_bounds = array<i64: 1, 128>}, {transform_indices = @transform_11, window_bounds = array<i64: 16, 128>}, {pipeline_mode = #tpu.pipeline_mode<synchronous>, transform_indices = @transform_12, window_bounds = array<i64: 16, 32>}]} {
    %c16_i32 = arith.constant 16 : i32
    %0 = arith.muli %arg0, %c16_i32 : i32
    %c0_i32 = arith.constant 0 : i32
    %1 = arith.cmpi eq, %arg0, %c0_i32 : i32
    %2 = arith.extui %1 : i1 to i32
    %c0_i32_0 = arith.constant 0 : i32
    %3 = arith.cmpi ne, %2, %c0_i32_0 : i32
    scf.if %3 {
      %cst_39 = arith.constant 0.000000e+00 : f32
      %47 = vector.broadcast %cst_39 : f32 to vector<16x32xf32>
      %c0_40 = arith.constant 0 : index
      %c0_41 = arith.constant 0 : index
      %48 = vector.load %arg15[%c0_40, %c0_41] : memref<16x32xf32, #tpu.memory_space<vmem>>, vector<16x32xf32>
      tpu.vector_store %arg15[%c0_40, %c0_41], %47 {strides = array<i32>} : memref<16x32xf32, #tpu.memory_space<vmem>>, vector<16x32xf32>,
    } else {
    }
    %c0_i32_1 = arith.constant 0 : i32
    %c16_i32_2 = arith.constant 16 : i32
    %4 = arith.addi %c0_i32_1, %c16_i32_2 : i32
    %c1_i32 = arith.constant 1 : i32
    scf.for %arg18 = %c0_i32_1 to %4 step %c1_i32  : i32 {
      %47 = arith.addi %0, %arg18 : i32
      %48 = arith.index_cast %47 : i32 to index
      %49 = memref.load %arg1[%48] : memref<48xi32, #tpu.memory_space<smem>>
      %c15_i32 = arith.constant 15 : i32
      %50 = arith.minsi %49, %c15_i32 : i32
      %51 = arith.addi %0, %arg18 : i32
      %52 = arith.index_cast %51 : i32 to index
      %53 = memref.load %arg2[%52] : memref<48xi32, #tpu.memory_space<smem>>
      %c15_i32_39 = arith.constant 15 : i32
      %54 = arith.minsi %53, %c15_i32_39 : i32
      %55 = arith.index_cast %50 : i32 to index
      %c0_40 = arith.constant 0 : index
      %56 = vector.load %arg5[%55, %c0_40] : memref<16x12xf32, #tpu.memory_space<vmem>>, vector<1x12xf32>
      %57 = arith.index_cast %arg18 : i32 to index
      %c0_41 = arith.constant 0 : index
      %58 = vector.load %arg16[%57, %c0_41] : memref<16x12xf32, #tpu.memory_space<vmem>>, vector<1x12xf32>
      tpu.vector_store %arg16[%57, %c0_41], %56 {strides = array<i32>} : memref<16x12xf32, #tpu.memory_space<vmem>>, vector<1x12xf32>,
      %59 = arith.index_cast %54 : i32 to index
      %c0_42 = arith.constant 0 : index
      %60 = vector.load %arg5[%59, %c0_42] : memref<16x12xf32, #tpu.memory_space<vmem>>, vector<1x12xf32>
      %61 = arith.index_cast %arg18 : i32 to index
      %c0_43 = arith.constant 0 : index
      %62 = vector.load %arg17[%61, %c0_43] : memref<16x12xf32, #tpu.memory_space<vmem>>, vector<1x12xf32>
      tpu.vector_store %arg17[%61, %c0_43], %60 {strides = array<i32>} : memref<16x12xf32, #tpu.memory_space<vmem>>, vector<1x12xf32>,
    }
    %c16_i32_3 = arith.constant 16 : i32
    %c0 = arith.constant 0 : index
    %c0_4 = arith.constant 0 : index
    %5 = vector.load %arg16[%c0, %c0_4] : memref<16x12xf32, #tpu.memory_space<vmem>>, vector<16x12xf32>
    %6 = arith.truncf %5 : vector<16x12xf32> to vector<16x12xbf16>
    %c0_5 = arith.constant 0 : index
    %c0_6 = arith.constant 0 : index
    %7 = vector.load %arg6[%c0_5, %c0_6] : memref<12x32xbf16, #tpu.memory_space<vmem>>, vector<12x32xbf16>
    %cst = arith.constant dense<0.000000e+00> : vector<16x32xf32>
    %8 = tpu.matmul %6, %7, %cst {dimension_numbers = #tpu.dot_dimension_numbers<[1], [0], [0], [1], [0, 0, 1, 1], [], []>} : vector<16x12xbf16>, vector<12x32xbf16>, vector<16x32xf32> -> vector<16x32xf32>
    %c0_7 = arith.constant 0 : index
    %c0_8 = arith.constant 0 : index
    %9 = vector.load %arg17[%c0_7, %c0_8] : memref<16x12xf32, #tpu.memory_space<vmem>>, vector<16x12xf32>
    %10 = arith.truncf %9 : vector<16x12xf32> to vector<16x12xbf16>
    %c0_9 = arith.constant 0 : index
    %c0_10 = arith.constant 0 : index
    %11 = vector.load %arg7[%c0_9, %c0_10] : memref<12x32xbf16, #tpu.memory_space<vmem>>, vector<12x32xbf16>
    %cst_11 = arith.constant dense<0.000000e+00> : vector<16x32xf32>
    %12 = tpu.matmul %10, %11, %cst_11 {dimension_numbers = #tpu.dot_dimension_numbers<[1], [0], [0], [1], [0, 0, 1, 1], [], []>} : vector<16x12xbf16>, vector<12x32xbf16>, vector<16x32xf32> -> vector<16x32xf32>
    %13 = arith.addf %8, %12 : vector<16x32xf32>
    %c0_12 = arith.constant 0 : index
    %c0_13 = arith.constant 0 : index
    %14 = vector.load %arg4[%c0_12, %c0_13] : memref<16x8xbf16, #tpu.memory_space<vmem>>, vector<16x8xbf16>
    %c0_14 = arith.constant 0 : index
    %c0_15 = arith.constant 0 : index
    %15 = vector.load %arg8[%c0_14, %c0_15] : memref<8x32xbf16, #tpu.memory_space<vmem>>, vector<8x32xbf16>
    %cst_16 = arith.constant dense<0.000000e+00> : vector<16x32xf32>
    %16 = tpu.matmul %14, %15, %cst_16 {dimension_numbers = #tpu.dot_dimension_numbers<[1], [0], [0], [1], [0, 0, 1, 1], [], []>} : vector<16x8xbf16>, vector<8x32xbf16>, vector<16x32xf32> -> vector<16x32xf32>
    %17 = arith.addf %13, %16 : vector<16x32xf32>
    %c0_17 = arith.constant 0 : index
    %c0_18 = arith.constant 0 : index
    %18 = vector.load %arg9[%c0_17, %c0_18] : memref<1x32xf32, #tpu.memory_space<vmem>>, vector<1x32xf32>
    %19 = vector.broadcast %18 : vector<1x32xf32> to vector<16x32xf32>
    %20 = arith.addf %17, %19 : vector<16x32xf32>
    %cst_19 = arith.constant 0.000000e+00 : f32
    %21 = vector.broadcast %cst_19 : f32 to vector<16x32xf32>
    %22 = arith.maximumf %20, %21 : vector<16x32xf32>
    %23 = arith.truncf %22 : vector<16x32xf32> to vector<16x32xbf16>
    %c0_20 = arith.constant 0 : index
    %c0_21 = arith.constant 0 : index
    %24 = vector.load %arg10[%c0_20, %c0_21] : memref<32x32xbf16, #tpu.memory_space<vmem>>, vector<32x32xbf16>
    %cst_22 = arith.constant dense<0.000000e+00> : vector<16x32xf32>
    %25 = tpu.matmul %23, %24, %cst_22 {dimension_numbers = #tpu.dot_dimension_numbers<[1], [0], [0], [1], [0, 0, 1, 1], [], []>} : vector<16x32xbf16>, vector<32x32xbf16>, vector<16x32xf32> -> vector<16x32xf32>
    %c0_23 = arith.constant 0 : index
    %c0_24 = arith.constant 0 : index
    %26 = vector.load %arg11[%c0_23, %c0_24] : memref<1x32xf32, #tpu.memory_space<vmem>>, vector<1x32xf32>
    %27 = vector.broadcast %26 : vector<1x32xf32> to vector<16x32xf32>
    %28 = arith.addf %25, %27 : vector<16x32xf32>
    %29 = tpu.iota {dimensions = array<i32: 1>} : vector<16x16xi32>
    %c0_25 = arith.constant 0 : index
    %c0_26 = arith.constant 0 : index
    %30 = vector.load %arg3[%c0_25, %c0_26] : memref<16x1xi32, #tpu.memory_space<vmem>>, vector<16x1xi32>
    %31 = vector.broadcast %30 : vector<16x1xi32> to vector<16x16xi32>
    %32 = arith.cmpi eq, %31, %29 : vector<16x16xi32>
    %33 = arith.extui %32 : vector<16x16xi1> to vector<16x16xi32>
    %34 = arith.sitofp %33 : vector<16x16xi32> to vector<16x16xf32>
    %c0_27 = arith.constant 0 : index
    %c0_28 = arith.constant 0 : index
    %35 = vector.load %arg15[%c0_27, %c0_28] : memref<16x32xf32, #tpu.memory_space<vmem>>, vector<16x32xf32>
    %cst_29 = arith.constant dense<0.000000e+00> : vector<16x32xf32>
    %36 = tpu.matmul %34, %28, %cst_29 {dimension_numbers = #tpu.dot_dimension_numbers<[0], [0], [1], [1], [0, 1, 1, 1], [], []>} : vector<16x16xf32>, vector<16x32xf32>, vector<16x32xf32> -> vector<16x32xf32>
    %37 = arith.addf %35, %36 : vector<16x32xf32>
    %c0_30 = arith.constant 0 : index
    %c0_31 = arith.constant 0 : index
    %38 = vector.load %arg15[%c0_30, %c0_31] : memref<16x32xf32, #tpu.memory_space<vmem>>, vector<16x32xf32>
    tpu.vector_store %arg15[%c0_30, %c0_31], %37 {strides = array<i32>} : memref<16x32xf32, #tpu.memory_space<vmem>>, vector<16x32xf32>,
    %39 = arith.truncf %28 : vector<16x32xf32> to vector<16x32xbf16>
    %c0_32 = arith.constant 0 : index
    %c0_33 = arith.constant 0 : index
    %40 = vector.load %arg12[%c0_32, %c0_33] : memref<32x128xbf16, #tpu.memory_space<vmem>>, vector<32x128xbf16>
    %cst_34 = arith.constant dense<0.000000e+00> : vector<16x128xf32>
    %41 = tpu.matmul %39, %40, %cst_34 {dimension_numbers = #tpu.dot_dimension_numbers<[1], [0], [0], [1], [0, 0, 1, 1], [], []>} : vector<16x32xbf16>, vector<32x128xbf16>, vector<16x128xf32> -> vector<16x128xf32>
    %c0_35 = arith.constant 0 : index
    %c0_36 = arith.constant 0 : index
    %42 = vector.load %arg13[%c0_35, %c0_36] : memref<1x128xf32, #tpu.memory_space<vmem>>, vector<1x128xf32>
    %43 = vector.broadcast %42 : vector<1x128xf32> to vector<16x128xf32>
    %44 = arith.addf %41, %43 : vector<16x128xf32>
    %45 = arith.truncf %44 : vector<16x128xf32> to vector<16x128xbf16>
    %c0_37 = arith.constant 0 : index
    %c0_38 = arith.constant 0 : index
    %46 = vector.load %arg14[%c0_37, %c0_38] : memref<16x128xbf16, #tpu.memory_space<vmem>>, vector<16x128xbf16>
    tpu.vector_store %arg14[%c0_37, %c0_38], %45 {strides = array<i32>} : memref<16x128xbf16, #tpu.memory_space<vmem>>, vector<16x128xbf16>,
    return
  }
  func.func @transform_0(%arg0: i32, %arg1: memref<48xi32, #tpu.memory_space<smem>>, %arg2: memref<48xi32, #tpu.memory_space<smem>>) -> (i32, i32) {
    %c0_i32 = arith.constant 0 : i32
    %c0_i32_0 = arith.constant 0 : i32
    return %arg0, %c0_i32 : i32, i32
  }
  func.func @transform_1(%arg0: i32, %arg1: memref<48xi32, #tpu.memory_space<smem>>, %arg2: memref<48xi32, #tpu.memory_space<smem>>) -> (i32, i32) {
    %c0_i32 = arith.constant 0 : i32
    %c0_i32_0 = arith.constant 0 : i32
    return %arg0, %c0_i32 : i32, i32
  }
  func.func @transform_2(%arg0: i32, %arg1: memref<48xi32, #tpu.memory_space<smem>>, %arg2: memref<48xi32, #tpu.memory_space<smem>>) -> (i32, i32) {
    %c0_i32 = arith.constant 0 : i32
    %c0_i32_0 = arith.constant 0 : i32
    %c0_i32_1 = arith.constant 0 : i32
    return %c0_i32, %c0_i32_0 : i32, i32
  }
  func.func @transform_3(%arg0: i32, %arg1: memref<48xi32, #tpu.memory_space<smem>>, %arg2: memref<48xi32, #tpu.memory_space<smem>>) -> (i32, i32) {
    %c0_i32 = arith.constant 0 : i32
    %c0_i32_0 = arith.constant 0 : i32
    %c0_i32_1 = arith.constant 0 : i32
    return %c0_i32, %c0_i32_0 : i32, i32
  }
  func.func @transform_4(%arg0: i32, %arg1: memref<48xi32, #tpu.memory_space<smem>>, %arg2: memref<48xi32, #tpu.memory_space<smem>>) -> (i32, i32) {
    %c0_i32 = arith.constant 0 : i32
    %c0_i32_0 = arith.constant 0 : i32
    %c0_i32_1 = arith.constant 0 : i32
    return %c0_i32, %c0_i32_0 : i32, i32
  }
  func.func @transform_5(%arg0: i32, %arg1: memref<48xi32, #tpu.memory_space<smem>>, %arg2: memref<48xi32, #tpu.memory_space<smem>>) -> (i32, i32) {
    %c0_i32 = arith.constant 0 : i32
    %c0_i32_0 = arith.constant 0 : i32
    %c0_i32_1 = arith.constant 0 : i32
    return %c0_i32, %c0_i32_0 : i32, i32
  }
  func.func @transform_6(%arg0: i32, %arg1: memref<48xi32, #tpu.memory_space<smem>>, %arg2: memref<48xi32, #tpu.memory_space<smem>>) -> (i32, i32) {
    %c0_i32 = arith.constant 0 : i32
    %c0_i32_0 = arith.constant 0 : i32
    %c0_i32_1 = arith.constant 0 : i32
    return %c0_i32, %c0_i32_0 : i32, i32
  }
  func.func @transform_7(%arg0: i32, %arg1: memref<48xi32, #tpu.memory_space<smem>>, %arg2: memref<48xi32, #tpu.memory_space<smem>>) -> (i32, i32) {
    %c0_i32 = arith.constant 0 : i32
    %c0_i32_0 = arith.constant 0 : i32
    %c0_i32_1 = arith.constant 0 : i32
    return %c0_i32, %c0_i32_0 : i32, i32
  }
  func.func @transform_8(%arg0: i32, %arg1: memref<48xi32, #tpu.memory_space<smem>>, %arg2: memref<48xi32, #tpu.memory_space<smem>>) -> (i32, i32) {
    %c0_i32 = arith.constant 0 : i32
    %c0_i32_0 = arith.constant 0 : i32
    %c0_i32_1 = arith.constant 0 : i32
    return %c0_i32, %c0_i32_0 : i32, i32
  }
  func.func @transform_9(%arg0: i32, %arg1: memref<48xi32, #tpu.memory_space<smem>>, %arg2: memref<48xi32, #tpu.memory_space<smem>>) -> (i32, i32) {
    %c0_i32 = arith.constant 0 : i32
    %c0_i32_0 = arith.constant 0 : i32
    %c0_i32_1 = arith.constant 0 : i32
    return %c0_i32, %c0_i32_0 : i32, i32
  }
  func.func @transform_10(%arg0: i32, %arg1: memref<48xi32, #tpu.memory_space<smem>>, %arg2: memref<48xi32, #tpu.memory_space<smem>>) -> (i32, i32) {
    %c0_i32 = arith.constant 0 : i32
    %c0_i32_0 = arith.constant 0 : i32
    %c0_i32_1 = arith.constant 0 : i32
    return %c0_i32, %c0_i32_0 : i32, i32
  }
  func.func @transform_11(%arg0: i32, %arg1: memref<48xi32, #tpu.memory_space<smem>>, %arg2: memref<48xi32, #tpu.memory_space<smem>>) -> (i32, i32) {
    %c0_i32 = arith.constant 0 : i32
    %c0_i32_0 = arith.constant 0 : i32
    return %arg0, %c0_i32 : i32, i32
  }
  func.func @transform_12(%arg0: i32, %arg1: memref<48xi32, #tpu.memory_space<smem>>, %arg2: memref<48xi32, #tpu.memory_space<smem>>) -> (i32, i32) {
    %c0_i32 = arith.constant 0 : i32
    %c0_i32_0 = arith.constant 0 : i32
    %c0_i32_1 = arith.constant 0 : i32
    return %c0_i32, %c0_i32_0 : i32, i32
  }
}

</mosaic_0001>

<llo_original>
// kernel: tpu_custom_call.1
$region0: #{tpu_custom_call.1}
  #allocation0 [shape = 'u32[]', space=smem, size = 0x4, offset = 0x4, fixed_abs, tag = 'smem constant byte address 0x4 - core index']
  #allocation1 [shape = 'u32[144,128]{1,0:T(1,128)}', space=vmem, size = 0x12000, scoped, tag = 'internal scratch']
  #allocation2 [shape = 'f32[16,12]{1,0:T(8,128)}', space=vmem, size = 0x2000, scoped, tag = 'scratch operand']
  #allocation3 [shape = 'f32[16,12]{1,0:T(8,128)}', space=vmem, size = 0x2000, scoped, tag = 'scratch operand']
  #allocation4 [shape = 's32[1]{0}', space=sflag, size = 0x4, scoped, tag = 'scoped memory for tpu_custom_call.1']
  #allocation5 [shape = 'u8[512]{0}', space=smem, size = 0x200, scoped, tag = 'prefetched SMEM operand 0']
  #allocation6 [shape = 'u8[512]{0}', space=smem, size = 0x200, scoped, tag = 'prefetched SMEM operand 1']
  %s0 = inlined_call_operand.vmem [shape: s32[48], index: 0, kind: input, shape index: {}]
  %s1 = inlined_call_operand.vmem [shape: s32[48], index: 1, kind: input, shape index: {}]
  %s2 = inlined_call_operand.vmem [shape: s32[48,1], index: 2, kind: input, shape index: {}]
  %s3 = inlined_call_operand.vmem [shape: bf16[48,8], index: 3, kind: input, shape index: {}]
  %s4 = inlined_call_operand.vmem [shape: f32[16,12], index: 4, kind: input, shape index: {}]
  %s5 = inlined_call_operand.vmem [shape: bf16[12,32], index: 5, kind: input, shape index: {}]
  %s6 = inlined_call_operand.vmem [shape: bf16[12,32], index: 6, kind: input, shape index: {}]
  %s7 = inlined_call_operand.vmem [shape: bf16[8,32], index: 7, kind: input, shape index: {}]
  %s8 = inlined_call_operand.vmem [shape: f32[1,32], index: 8, kind: input, shape index: {}]
  %s9 = inlined_call_operand.vmem [shape: bf16[32,32], index: 9, kind: input, shape index: {}]
  %s10 = inlined_call_operand.vmem [shape: f32[1,32], index: 10, kind: input, shape index: {}]
  %s11 = inlined_call_operand.vmem [shape: bf16[32,128], index: 11, kind: input, shape index: {}]
  %s12 = inlined_call_operand.vmem [shape: f32[1,128], index: 12, kind: input, shape index: {}]
  %s13 = inlined_call_operand.hbm [shape: bf16[48,128], index: 13, kind: output, shape index: {0}]
  %s14 = inlined_call_operand.hbm [shape: f32[16,32], index: 14, kind: output, shape index: {1}]
  %15 = xla_tuple %s13, %s14
  %s16 = sld [smem:[#allocation0]]
  $region96: #{tpu_custom_call.1} parent=0
    _
  %s18 = ssub.s32 1, %s16
  %s19 = scalar_select 0, %s18, %s16
  %s20 = sshll.u32 %s0, 4
  %s21 = int_to_ptr.vmem [resolvable:$true] %s20
  %23 = dma.vmem_to_smem %s21, 16, [#allocation5], [#allocation4]
  %s24 = sshll.u32 %s1, 4
  %s25 = int_to_ptr.vmem [resolvable:$true] %s24
  %27 = dma.vmem_to_smem %s25, 16, [#allocation6], [#allocation4]
  %28 = dma.done [#allocation4], 32
  %29 = sfence
  $region1: #{tpu_custom_call.1} parent=0
    #allocation7 [shape = 'u8[8192]{0}', space=vmem, size = 0x2000, scoped, tag = 'output window, operand 0']
    #allocation8 [shape = 's32[2]{0}', space=sflag, size = 0x8, scoped, tag = 'scoped memory for tpu_custom_call.1']
    #allocation9 [shape = 'u8[8192]{0}', space=vmem, size = 0x2000, scoped, tag = 'output window, operand 1, single buffered']
    #allocation10 [shape = 's32[1]{0}', space=sflag, size = 0x4, scoped, tag = 'scoped memory for tpu_custom_call.1']
    %30 = vsyncpa [#allocation8], 0
    %s31 = scalar_lea.sflag [#allocation8], 1
    %32 = vsyncpa %s31, 0
    %33 = vsyncpa [#allocation10], 0
    loop: start=0, step=1, limit=5
    $region2: #{tpu_custom_call.1} parent=1 // loop_pre_header
      _
    $region3: #{tpu_custom_call.1} parent=1 // loop_header
      %s35 = sphi 0, %s39
      %p36 = scmp.ge.s32.totalorder %s35, 5
      %s45 = sphi 0, %s47
      %s48 = sphi 0, %s45
      %s49 = sphi 0, %s48
      %s65 = sphi 0, %s49
      %s71 = sphi 0, %s73
      %s74 = sphi 0, %s71
      %s75 = sphi 0, %s74
      %s91 = sphi 0, %s75
      %s95 = sphi 0, %s95
      %s97 = sphi 0, %s95
      %s98 = sphi 0, %s97
      %s112 = sphi 0, %s98
      %s116 = sphi 0, %s116
      %s118 = sphi 0, %s116
      %s119 = sphi 0, %s118
      %s133 = sphi 0, %s119
      %s137 = sphi 0, %s137
      %s139 = sphi 0, %s137
      %s140 = sphi 0, %s139
      %s154 = sphi 0, %s140
      %s158 = sphi 0, %s158
      %s160 = sphi 0, %s158
      %s161 = sphi 0, %s160
      %s175 = sphi 0, %s161
      %s179 = sphi 0, %s179
      %s181 = sphi 0, %s179
      %s182 = sphi 0, %s181
      %s196 = sphi 0, %s182
      %s200 = sphi 0, %s200
      %s202 = sphi 0, %s200
      %s203 = sphi 0, %s202
      %s217 = sphi 0, %s203
      %s221 = sphi 0, %s221
      %s223 = sphi 0, %s221
      %s224 = sphi 0, %s223
      %s238 = sphi 0, %s224
      %s242 = sphi 0, %s242
      %s244 = sphi 0, %s242
      %s245 = sphi 0, %s244
      %s259 = sphi 0, %s245
      %s263 = sphi 0, %s263
      %s265 = sphi 0, %s263
      %s266 = sphi 0, %s265
      %s280 = sphi 0, %s266
      %s286 = sphi 0, %s288
      %s289 = sphi 0, %s286
      %s290 = sphi 0, %s289
      %s306 = sphi 0, %s290
      %s310 = sphi 0, %s310
      %s312 = sphi 0, %s310
      %s313 = sphi 0, %s312
      %s327 = sphi 0, %s313
    $region4: #{tpu_custom_call.1} parent=1 // loop_header_branch
      %38 = sbr.rel (%p36) target = $region8
    $region5: #{tpu_custom_call.1} parent=1 // loop_body
      %s40 = ssub.s32 %s35, 1
      %s41 = ssub.s32 %s35, 2
      %s42 = sadd.s32 %s35, 1
      %s43 = ssub.s32 %s35, %s42
      %p44 = scmp.eq.s32.totalorder %s43, 0
      %s46 = sadd.s32 %s45, 1
      %s47 = scalar_select %p44, %s45, %s46
      %p50 = pneg %p44
      %p51 = scmp.eq.s32.totalorder %s35, 2
      %p52 = por %p50, %p51
      %p53 = scmp.ne.s32.totalorder %s45, %s48
      %p54 = scmp.eq.s32.totalorder %s35, 0
      %p55 = por %p53, %p54
      %p56 = scmp.ne.s32.totalorder %s45, %s48
      %p57 = scmp.eq.s32.totalorder %s40, 2
      %p58 = por %p56, %p57
      %p59 = scmp.ne.s32.totalorder %s48, %s49
      %p60 = scmp.eq.s32.totalorder %s40, 0
      %p61 = por %p59, %p60
      %p62 = scmp.ne.s32.totalorder %s48, %s49
      %p63 = scmp.eq.s32.totalorder %s41, 2
      %p64 = por %p62, %p63
      %p66 = scmp.ne.s32.totalorder %s49, %s65
      %p67 = scmp.eq.s32.totalorder %s41, 0
      %p68 = por %p66, %p67
      %s69 = ssub.s32 %s35, %s42
      %p70 = scmp.eq.s32.totalorder %s69, 0
      %s72 = sadd.s32 %s71, 1
      %s73 = scalar_select %p70, %s71, %s72
      %p76 = pneg %p70
      %p77 = scmp.eq.s32.totalorder %s35, 2
      %p78 = por %p76, %p77
      %p79 = scmp.ne.s32.totalorder %s71, %s74
      %p80 = scmp.eq.s32.totalorder %s35, 0
      %p81 = por %p79, %p80
      %p82 = scmp.ne.s32.totalorder %s71, %s74
      %p83 = scmp.eq.s32.totalorder %s40, 2
      %p84 = por %p82, %p83
      %p85 = scmp.ne.s32.totalorder %s74, %s75
      %p86 = scmp.eq.s32.totalorder %s40, 0
      %p87 = por %p85, %p86
      %p88 = scmp.ne.s32.totalorder %s74, %s75
      %p89 = scmp.eq.s32.totalorder %s41, 2
      %p90 = por %p88, %p89
      %p92 = scmp.ne.s32.totalorder %s75, %s91
      %p93 = scmp.eq.s32.totalorder %s41, 0
      %p94 = por %p92, %p93
      %s96 = sadd.s32 %s95, 1
      %p99 = scmp.eq.s32.totalorder %s35, 2
      %p100 = scmp.ne.s32.totalorder %s95, %s97
      %p101 = scmp.eq.s32.totalorder %s35, 0
      %p102 = por %p100, %p101
      %p103 = scmp.ne.s32.totalorder %s95, %s97
      %p104 = scmp.eq.s32.totalorder %s40, 2
      %p105 = por %p103, %p104
      %p106 = scmp.ne.s32.totalorder %s97, %s98
      %p107 = scmp.eq.s32.totalorder %s40, 0
      %p108 = por %p106, %p107
      %p109 = scmp.ne.s32.totalorder %s97, %s98
      %p110 = scmp.eq.s32.totalorder %s41, 2
      %p111 = por %p109, %p110
      %p113 = scmp.ne.s32.totalorder %s98, %s112
      %p114 = scmp.eq.s32.totalorder %s41, 0
      %p115 = por %p113, %p114
      %s117 = sadd.s32 %s116, 1
      %p120 = scmp.eq.s32.totalorder %s35, 2
      %p121 = scmp.ne.s32.totalorder %s116, %s118
      %p122 = scmp.eq.s32.totalorder %s35, 0
      %p123 = por %p121, %p122
      %p124 = scmp.ne.s32.totalorder %s116, %s118
      %p125 = scmp.eq.s32.totalorder %s40, 2
      %p126 = por %p124, %p125
      %p127 = scmp.ne.s32.totalorder %s118, %s119
      %p128 = scmp.eq.s32.totalorder %s40, 0
      %p129 = por %p127, %p128
      %p130 = scmp.ne.s32.totalorder %s118, %s119
      %p131 = scmp.eq.s32.totalorder %s41, 2
      %p132 = por %p130, %p131
      %p134 = scmp.ne.s32.totalorder %s119, %s133
      %p135 = scmp.eq.s32.totalorder %s41, 0
      %p136 = por %p134, %p135
      %s138 = sadd.s32 %s137, 1
      %p141 = scmp.eq.s32.totalorder %s35, 2
      %p142 = scmp.ne.s32.totalorder %s137, %s139
      %p143 = scmp.eq.s32.totalorder %s35, 0
      %p144 = por %p142, %p143
      %p145 = scmp.ne.s32.totalorder %s137, %s139
      %p146 = scmp.eq.s32.totalorder %s40, 2
      %p147 = por %p145, %p146
      %p148 = scmp.ne.s32.totalorder %s139, %s140
      %p149 = scmp.eq.s32.totalorder %s40, 0
      %p150 = por %p148, %p149
      %p151 = scmp.ne.s32.totalorder %s139, %s140
      %p152 = scmp.eq.s32.totalorder %s41, 2
      %p153 = por %p151, %p152
      %p155 = scmp.ne.s32.totalorder %s140, %s154
      %p156 = scmp.eq.s32.totalorder %s41, 0
      %p157 = por %p155, %p156
      %s159 = sadd.s32 %s158, 1
      %p162 = scmp.eq.s32.totalorder %s35, 2
      %p163 = scmp.ne.s32.totalorder %s158, %s160
      %p164 = scmp.eq.s32.totalorder %s35, 0
      %p165 = por %p163, %p164
      %p166 = scmp.ne.s32.totalorder %s158, %s160
      %p167 = scmp.eq.s32.totalorder %s40, 2
      %p168 = por %p166, %p167
      %p169 = scmp.ne.s32.totalorder %s160, %s161
      %p170 = scmp.eq.s32.totalorder %s40, 0
      %p171 = por %p169, %p170
      %p172 = scmp.ne.s32.totalorder %s160, %s161
      %p173 = scmp.eq.s32.totalorder %s41, 2
      %p174 = por %p172, %p173
      %p176 = scmp.ne.s32.totalorder %s161, %s175
      %p177 = scmp.eq.s32.totalorder %s41, 0
      %p178 = por %p176, %p177
      %s180 = sadd.s32 %s179, 1
      %p183 = scmp.eq.s32.totalorder %s35, 2
      %p184 = scmp.ne.s32.totalorder %s179, %s181
      %p185 = scmp.eq.s32.totalorder %s35, 0
      %p186 = por %p184, %p185
      %p187 = scmp.ne.s32.totalorder %s179, %s181
      %p188 = scmp.eq.s32.totalorder %s40, 2
      %p189 = por %p187, %p188
      %p190 = scmp.ne.s32.totalorder %s181, %s182
      %p191 = scmp.eq.s32.totalorder %s40, 0
      %p192 = por %p190, %p191
      %p193 = scmp.ne.s32.totalorder %s181, %s182
      %p194 = scmp.eq.s32.totalorder %s41, 2
      %p195 = por %p193, %p194
      %p197 = scmp.ne.s32.totalorder %s182, %s196
      %p198 = scmp.eq.s32.totalorder %s41, 0
      %p199 = por %p197, %p198
      %s201 = sadd.s32 %s200, 1
      %p204 = scmp.eq.s32.totalorder %s35, 2
      %p205 = scmp.ne.s32.totalorder %s200, %s202
      %p206 = scmp.eq.s32.totalorder %s35, 0
      %p207 = por %p205, %p206
      %p208 = scmp.ne.s32.totalorder %s200, %s202
      %p209 = scmp.eq.s32.totalorder %s40, 2
      %p210 = por %p208, %p209
      %p211 = scmp.ne.s32.totalorder %s202, %s203
      %p212 = scmp.eq.s32.totalorder %s40, 0
      %p213 = por %p211, %p212
      %p214 = scmp.ne.s32.totalorder %s202, %s203
      %p215 = scmp.eq.s32.totalorder %s41, 2
      %p216 = por %p214, %p215
      %p218 = scmp.ne.s32.totalorder %s203, %s217
      %p219 = scmp.eq.s32.totalorder %s41, 0
      %p220 = por %p218, %p219
      %s222 = sadd.s32 %s221, 1
      %p225 = scmp.eq.s32.totalorder %s35, 2
      %p226 = scmp.ne.s32.totalorder %s221, %s223
      %p227 = scmp.eq.s32.totalorder %s35, 0
      %p228 = por %p226, %p227
      %p229 = scmp.ne.s32.totalorder %s221, %s223
      %p230 = scmp.eq.s32.totalorder %s40, 2
      %p231 = por %p229, %p230
      %p232 = scmp.ne.s32.totalorder %s223, %s224
      %p233 = scmp.eq.s32.totalorder %s40, 0
      %p234 = por %p232, %p233
      %p235 = scmp.ne.s32.totalorder %s223, %s224
      %p236 = scmp.eq.s32.totalorder %s41, 2
      %p237 = por %p235, %p236
      %p239 = scmp.ne.s32.totalorder %s224, %s238
      %p240 = scmp.eq.s32.totalorder %s41, 0
      %p241 = por %p239, %p240
      %s243 = sadd.s32 %s242, 1
      %p246 = scmp.eq.s32.totalorder %s35, 2
      %p247 = scmp.ne.s32.totalorder %s242, %s244
      %p248 = scmp.eq.s32.totalorder %s35, 0
      %p249 = por %p247, %p248
      %p250 = scmp.ne.s32.totalorder %s242, %s244
      %p251 = scmp.eq.s32.totalorder %s40, 2
      %p252 = por %p250, %p251
      %p253 = scmp.ne.s32.totalorder %s244, %s245
      %p254 = scmp.eq.s32.totalorder %s40, 0
      %p255 = por %p253, %p254
      %p256 = scmp.ne.s32.totalorder %s244, %s245
      %p257 = scmp.eq.s32.totalorder %s41, 2
      %p258 = por %p256, %p257
      %p260 = scmp.ne.s32.totalorder %s245, %s259
      %p261 = scmp.eq.s32.totalorder %s41, 0
      %p262 = por %p260, %p261
      %s264 = sadd.s32 %s263, 1
      %p267 = scmp.eq.s32.totalorder %s35, 2
      %p268 = scmp.ne.s32.totalorder %s263, %s265
      %p269 = scmp.eq.s32.totalorder %s35, 0
      %p270 = por %p268, %p269
      %p271 = scmp.ne.s32.totalorder %s263, %s265
      %p272 = scmp.eq.s32.totalorder %s40, 2
      %p273 = por %p271, %p272
      %p274 = scmp.ne.s32.totalorder %s265, %s266
      %p275 = scmp.eq.s32.totalorder %s40, 0
      %p276 = por %p274, %p275
      %p277 = scmp.ne.s32.totalorder %s265, %s266
      %p278 = scmp.eq.s32.totalorder %s41, 2
      %p279 = por %p277, %p278
      %p281 = scmp.ne.s32.totalorder %s266, %s280
      %p282 = scmp.eq.s32.totalorder %s41, 0
      %p283 = por %p281, %p282
      %s284 = ssub.s32 %s35, %s42
      %p285 = scmp.eq.s32.totalorder %s284, 0
      %s287 = sadd.s32 %s286, 1
      %s288 = scalar_select %p285, %s286, %s287
      %p291 = pneg %p285
      %p292 = scmp.eq.s32.totalorder %s35, 2
      %p293 = por %p291, %p292
      %p294 = scmp.ne.s32.totalorder %s286, %s289
      %p295 = scmp.eq.s32.totalorder %s35, 0
      %p296 = por %p294, %p295
      %p297 = scmp.ne.s32.totalorder %s286, %s289
      %p298 = scmp.eq.s32.totalorder %s40, 2
      %p299 = por %p297, %p298
      %p300 = scmp.ne.s32.totalorder %s289, %s290
      %p301 = scmp.eq.s32.totalorder %s40, 0
      %p302 = por %p300, %p301
      %p303 = scmp.ne.s32.totalorder %s289, %s290
      %p304 = scmp.eq.s32.totalorder %s41, 2
      %p305 = por %p303, %p304
      %p307 = scmp.ne.s32.totalorder %s290, %s306
      %p308 = scmp.eq.s32.totalorder %s41, 0
      %p309 = por %p307, %p308
      %s311 = sadd.s32 %s310, 1
      %p314 = scmp.eq.s32.totalorder %s35, 2
      %p315 = scmp.ne.s32.totalorder %s310, %s312
      %p316 = scmp.eq.s32.totalorder %s35, 0
      %p317 = por %p315, %p316
      %p318 = scmp.ne.s32.totalorder %s310, %s312
      %p319 = scmp.eq.s32.totalorder %s40, 2
      %p320 = por %p318, %p319
      %p321 = scmp.ne.s32.totalorder %s312, %s313
      %p322 = scmp.eq.s32.totalorder %s40, 0
      %p323 = por %p321, %p322
      %p324 = scmp.ne.s32.totalorder %s312, %s313
      %p325 = scmp.eq.s32.totalorder %s41, 2
      %p326 = por %p324, %p325
      %p328 = scmp.ne.s32.totalorder %s313, %s327
      %p329 = scmp.eq.s32.totalorder %s41, 0
      %p330 = por %p328, %p329
      %p331 = scmp.le.s32.totalorder 1, %s35
      %p332 = scmp.lt.s32.totalorder %s35, 4
      %p333 = pnand %p331, %p332
      %p334 = pneg %p333
      // Predicated region
      $region9: #{tpu_custom_call.1} parent=5 // pred_check
        _
      $region10: #{tpu_custom_call.1} parent=5 // pred_check_branch
        %336 = sbr.rel (%p333) target = $region12
      $region11: #{tpu_custom_call.1} parent=5 // pred_region
        %s337 = ssub.s32 %s35, 1
        // Predicated region
        $region13: #{tpu_custom_call.1} parent=11 // pred_check
          %p338 = pneg %p108
        $region14: #{tpu_custom_call.1} parent=11 // pred_check_branch
          %340 = sbr.rel (%p338) target = $region16
        $region15: #{tpu_custom_call.1} parent=11 // pred_region
          _
        $region16: #{tpu_custom_call.1} parent=11 // pred_fallthru
          _
        // Predicated region
        $region17: #{tpu_custom_call.1} parent=11 // pred_check
          %p341 = pneg %p129
        $region18: #{tpu_custom_call.1} parent=11 // pred_check_branch
          %343 = sbr.rel (%p341) target = $region20
        $region19: #{tpu_custom_call.1} parent=11 // pred_region
          _
        $region20: #{tpu_custom_call.1} parent=11 // pred_fallthru
          _
        // Predicated region
        $region21: #{tpu_custom_call.1} parent=11 // pred_check
          %p344 = pneg %p150
        $region22: #{tpu_custom_call.1} parent=11 // pred_check_branch
          %346 = sbr.rel (%p344) target = $region24
        $region23: #{tpu_custom_call.1} parent=11 // pred_region
          _
        $region24: #{tpu_custom_call.1} parent=11 // pred_fallthru
          _
        // Predicated region
        $region25: #{tpu_custom_call.1} parent=11 // pred_check
          %p347 = pneg %p171
        $region26: #{tpu_custom_call.1} parent=11 // pred_check_branch
          %349 = sbr.rel (%p347) target = $region28
        $region27: #{tpu_custom_call.1} parent=11 // pred_region
          _
        $region28: #{tpu_custom_call.1} parent=11 // pred_fallthru
          _
        // Predicated region
        $region29: #{tpu_custom_call.1} parent=11 // pred_check
          %p350 = pneg %p192
        $region30: #{tpu_custom_call.1} parent=11 // pred_check_branch
          %352 = sbr.rel (%p350) target = $region32
        $region31: #{tpu_custom_call.1} parent=11 // pred_region
          _
        $region32: #{tpu_custom_call.1} parent=11 // pred_fallthru
          _
        // Predicated region
        $region33: #{tpu_custom_call.1} parent=11 // pred_check
          %p353 = pneg %p213
        $region34: #{tpu_custom_call.1} parent=11 // pred_check_branch
          %355 = sbr.rel (%p353) target = $region36
        $region35: #{tpu_custom_call.1} parent=11 // pred_region
          _
        $region36: #{tpu_custom_call.1} parent=11 // pred_fallthru
          _
        // Predicated region
        $region37: #{tpu_custom_call.1} parent=11 // pred_check
          %p356 = pneg %p234
        $region38: #{tpu_custom_call.1} parent=11 // pred_check_branch
          %358 = sbr.rel (%p356) target = $region40
        $region39: #{tpu_custom_call.1} parent=11 // pred_region
          _
        $region40: #{tpu_custom_call.1} parent=11 // pred_fallthru
          _
        // Predicated region
        $region41: #{tpu_custom_call.1} parent=11 // pred_check
          %p359 = pneg %p255
        $region42: #{tpu_custom_call.1} parent=11 // pred_check_branch
          %361 = sbr.rel (%p359) target = $region44
        $region43: #{tpu_custom_call.1} parent=11 // pred_region
          _
        $region44: #{tpu_custom_call.1} parent=11 // pred_fallthru
          _
        // Predicated region
        $region45: #{tpu_custom_call.1} parent=11 // pred_check
          %p362 = pneg %p276
        $region46: #{tpu_custom_call.1} parent=11 // pred_check_branch
          %364 = sbr.rel (%p362) target = $region48
        $region47: #{tpu_custom_call.1} parent=11 // pred_region
          _
        $region48: #{tpu_custom_call.1} parent=11 // pred_fallthru
          _
      $region12: #{tpu_custom_call.1} parent=5 // pred_fallthru
        _
      %p365 = scmp.lt.s32.totalorder %s35, 3
      // Predicated region
      $region49: #{tpu_custom_call.1} parent=5 // pred_check
        %p366 = pneg %p365
      $region50: #{tpu_custom_call.1} parent=5 // pred_check_branch
        %368 = sbr.rel (%p366) target = $region52
      $region51: #{tpu_custom_call.1} parent=5 // pred_region
        // Predicated region
        $region53: #{tpu_custom_call.1} parent=51 // pred_check
          %p369 = pneg %p55
        $region54: #{tpu_custom_call.1} parent=51 // pred_check_branch
          %371 = sbr.rel (%p369) target = $region56
        $region55: #{tpu_custom_call.1} parent=51 // pred_region
          %s372 = smul.u32 2, %s35
          %p373 = scmp.lt.s32.totalorder %s372, 5
          %s374 = scalar_select %p373, %s372, 5
          %s375 = smul.addr %s374, 8
          %s376 = scalar_lea.vmem %s2, %s375
          %s377 = smul.u32 2, %s35
        $region56: #{tpu_custom_call.1} parent=51 // pred_fallthru
          _
        // Predicated region
        $region57: #{tpu_custom_call.1} parent=51 // pred_check
          %p378 = pneg %p81
        $region58: #{tpu_custom_call.1} parent=51 // pred_check_branch
          %380 = sbr.rel (%p378) target = $region60
        $region59: #{tpu_custom_call.1} parent=51 // pred_region
          %s381 = smul.u32 2, %s35
          %p382 = scmp.lt.s32.totalorder %s381, 5
          %s383 = scalar_select %p382, %s381, 5
          %s384 = smul.addr %s383, 4
          %s385 = scalar_lea.vmem %s3, %s384
          %s386 = smul.u32 2, %s35
        $region60: #{tpu_custom_call.1} parent=51 // pred_fallthru
          _
      $region52: #{tpu_custom_call.1} parent=5 // pred_fallthru
        _
      %p387 = scmp.le.s32.totalorder 1, %s35
      %p388 = scmp.lt.s32.totalorder %s35, 4
      %p389 = pnand %p387, %p388
      %p390 = pneg %p389
      // Predicated region
      $region61: #{tpu_custom_call.1} parent=5 // pred_check
        _
      $region62: #{tpu_custom_call.1} parent=5 // pred_check_branch
        %392 = sbr.rel (%p389) target = $region64
      $region63: #{tpu_custom_call.1} parent=5 // pred_region
        %s393 = ssub.s32 %s35, 1
        %s394 = smul.u32 2, %s40
        %p395 = scmp.lt.s32.totalorder %s394, 5
        %s396 = scalar_select %p395, %s394, 5
        %s397 = smul.addr %s396, 8
        %s398 = scalar_lea.vmem %s2, %s397
        %p399 = pneg %p61
        %p400 = pneg %p58
        %s401 = smul.u32 2, %s40
        %p402 = scmp.lt.s32.totalorder %s401, 5
        %s403 = scalar_select %p402, %s401, 5
        %s404 = smul.addr %s403, 4
        %s405 = scalar_lea.vmem %s3, %s404
        %p406 = pneg %p87
        %p407 = pneg %p84
        %p408 = pneg %p108
        %p409 = pneg %p105
        %p410 = pneg %p129
        %p411 = pneg %p126
        %p412 = pneg %p150
        %p413 = pneg %p147
        %p414 = pneg %p171
        %p415 = pneg %p168
        %p416 = pneg %p192
        %p417 = pneg %p189
        %p418 = pneg %p213
        %p419 = pneg %p210
        %p420 = pneg %p234
        %p421 = pneg %p231
        %p422 = pneg %p255
        %p423 = pneg %p252
        %p424 = pneg %p276
        %p425 = pneg %p273
        %p426 = pneg %p302
        %p427 = pneg %p299
        %s428 = sand.u32 %s289, 1
        %s429 = scalar_lea.sflag [#allocation8], %s428
        %s430 = sand.u32 %s289, 1
        %s431 = smul.addr %s430, 8
        %s432 = scalar_lea.vmem [#allocation7], %s431
        %p433 = pneg %p323
        %p434 = pneg %p320
        %s435 = smul.u32 2, %s40
        %p436 = scmp.lt.s32.totalorder %s435, 5
        %s437 = scalar_select %p436, %s435, 5
        %s438 = smul.addr %s437, 8
        %s439 = scalar_lea.vmem %s2, %s438
        %s440 = smul.u32 2, %s40
        %s441 = smul.u32 2, %s40
        %p442 = scmp.lt.s32.totalorder %s441, 5
        %s443 = scalar_select %p442, %s441, 5
        %s444 = smul.addr %s443, 4
        %s445 = scalar_lea.vmem %s3, %s444
        %s446 = smul.u32 2, %s40
        %s447 = smul.u32 2, %s40
        %s449 = smul.u32 %s40, 16
        %p450 = scmp.eq.s32.totalorder %s40, 0
        // Predicated region
        $region65: #{tpu_custom_call.1} parent=63 // pred_check
          %p451 = pneg %p450
        $region66: #{tpu_custom_call.1} parent=63 // pred_check_branch
          %453 = sbr.rel (%p451) target = $region68
        $region67: #{tpu_custom_call.1} parent=63 // pred_region
          %vm454 = vcmask 261120
          %455 = vst.msk [vmem:[#allocation9] sm:$0xff] %vm454, 0.0
          %456 = vst.msk [vmem:[#allocation9 + $0x8] sm:$0xff] %vm454, 0.0
        $region68: #{tpu_custom_call.1} parent=63 // pred_fallthru
          _
        loop: start=0, step=1, limit=16
        $region69: #{tpu_custom_call.1} parent=63 // loop_pre_header
          _
        $region70: #{tpu_custom_call.1} parent=63 // loop_header
          %s458 = sphi 0, %s462
          %p459 = scmp.ge.s32.totalorder %s458, 16
        $region71: #{tpu_custom_call.1} parent=63 // loop_header_branch
          %461 = sbr.rel (%p459) target = $region75
        $region72: #{tpu_custom_call.1} parent=63 // loop_body
          %s463 = sadd.s32 %s449, %s458
          %s464 = sld [smem:[#allocation5 + %s463]]
          %p465 = scmp.lt.s32.totalorder %s464, 15
          %s466 = scalar_select %p465, %s464, 15
          %s467 = sld [smem:[#allocation6 + %s463]]
          %p468 = scmp.lt.s32.totalorder %s467, 15
          %s469 = scalar_select %p468, %s467, 15
          %s470 = scalar_lea.vmem %s4, %s466
          %v471 = vld [vmem:[%s470] sm:$0x1]
          %s472 = scalar_lea.vmem [#allocation2], %s458
          %vm473 = vcmask 90112
          %474 = vst.msk [vmem:[%s472] sm:$0x1] %vm473, %v471
          %s475 = scalar_lea.vmem %s4, %s469
          %v476 = vld [vmem:[%s475] sm:$0x1]
          %s477 = scalar_lea.vmem [#allocation3], %s458
          %478 = vst.msk [vmem:[%s477] sm:$0x1] %vm473, %v476
        $region73: #{tpu_custom_call.1} parent=63 // loop_footer
          %s462 = sadd.s32 1, %s458
        $region74: #{tpu_custom_call.1} parent=63 // loop_footer_branch
          %457 = sbr.rel target = $region70
        $region75: #{tpu_custom_call.1} parent=63 // loop_exit
          _
        %v479 = vld [vmem:[#allocation2] sm:$0xff]
        %v480 = vld [vmem:[#allocation2 + $0x8] sm:$0xff]
        %v481 = vpack.c.bf16 %v480, %v479
        %v482 = vld [vmem:[%s5] sm:$0xf]
        %v483 = vld [vmem:[%s5 + $0x4] sm:$0x3]
        %v484 = vld [vmem:[#allocation3] sm:$0xff]
        %v485 = vld [vmem:[#allocation3 + $0x8] sm:$0xff]
        %v486 = vpack.c.bf16 %v485, %v484
        %v487 = vld [vmem:[%s6] sm:$0xf]
        %v488 = vld [vmem:[%s6 + $0x4] sm:$0x3]
        %v491 = vunpack.c.l.b16 %v487
        %v492 = vunpack.c.l.b16 %v488
        %v493 = vpack.c.b16 %v492, %v491
        %vm494 = vcmask 97280
        %v496 = vsel %vm494, %v486, 0
        %vm498 = vcmask 1045504
        %v500 = vsel %vm498, %v493, 0
        %502 = vmatprep.subr.bf16.mxu0 0
        %503 = vmatpush1.bf16.msra.mxu0 %v500
        %504 = vmatprep.subr.bf16.mxu0 0
        %505 = vmatpush1.bf16.msra.mxu0 0
        %506 = vmatprep.subr.bf16.mxu0 0
        %507 = vmatpush1.bf16.msra.mxu0 0
        %508 = vmatprep.subr.bf16.mxu0 0
        %509 = vmatpush1.bf16.msra.mxu0 0
        %510 = vmatprep.subr.bf16.mxu0 0
        %511 = vmatpush1.bf16.msra.mxu0 0
        %512 = vmatprep.subr.bf16.mxu0 0
        %513 = vmatpush1.bf16.msra.mxu0 0
        %514 = vmatprep.subr.bf16.mxu0 0
        %515 = vmatpush1.bf16.msra.mxu0 0
        %516 = vmatprep.subr.bf16.mxu0 0
        %517 = vmatpush1.bf16.msra.mxu0 0
        %518 = vmatprep.subr.bf16.mxu0 0
        %519 = vmatpush1.bf16.msra.mxu0 0
        %520 = vmatprep.subr.bf16.mxu0 0
        %521 = vmatpush1.bf16.msra.mxu0 0
        %522 = vmatprep.subr.bf16.mxu0 0
        %523 = vmatpush1.bf16.msra.mxu0 0
        %524 = vmatprep.subr.bf16.mxu0 0
        %525 = vmatpush1.bf16.msra.mxu0 0
        %526 = vmatprep.subr.bf16.mxu0 0
        %527 = vmatpush1.bf16.msra.mxu0 0
        %528 = vmatprep.subr.bf16.mxu0 0
        %529 = vmatpush1.bf16.msra.mxu0 0
        %530 = vmatprep.subr.bf16.mxu0 0
        %531 = vmatpush1.bf16.msra.mxu0 0
        %532 = vmatprep.subr.bf16.mxu0 0
        %533 = vmatpush1.bf16.msra.mxu0 0
        %534 = vmatprep.mubr.bf16.mxu0 0
        %535 = vmatmul.mubr.bf16.gmra.mrb[0].mxu0 %v496
        %v536 = vpop.f32.mrb[0].mxu0
        %v537 = vadd.f32 0.0, %v536
        %v538 = vpop.f32.mrb[0].mxu0
        %v539 = vpop.f32.mrb[0].mxu0
        %v540 = vadd.f32 0.0, %v539
        %v541 = vpop.f32.mrb[0].mxu0
        %542 = vdwg.mxu0
        %v545 = vunpack.c.l.b16 %v482
        %v546 = vunpack.c.l.b16 %v483
        %v547 = vpack.c.b16 %v546, %v545
        %v549 = vsel %vm494, %v481, 0
        %v552 = vsel %vm498, %v547, 0
        %554 = vmatprep.subr.bf16.mxu0 0
        %555 = vmatpush1.bf16.msra.mxu0 %v552
        %556 = vmatprep.subr.bf16.mxu0 0
        %557 = vmatpush1.bf16.msra.mxu0 0
        %558 = vmatprep.subr.bf16.mxu0 0
        %559 = vmatpush1.bf16.msra.mxu0 0
        %560 = vmatprep.subr.bf16.mxu0 0
        %561 = vmatpush1.bf16.msra.mxu0 0
        %562 = vmatprep.subr.bf16.mxu0 0
        %563 = vmatpush1.bf16.msra.mxu0 0
        %564 = vmatprep.subr.bf16.mxu0 0
        %565 = vmatpush1.bf16.msra.mxu0 0
        %566 = vmatprep.subr.bf16.mxu0 0
        %567 = vmatpush1.bf16.msra.mxu0 0
        %568 = vmatprep.subr.bf16.mxu0 0
        %569 = vmatpush1.bf16.msra.mxu0 0
        %570 = vmatprep.subr.bf16.mxu0 0
        %571 = vmatpush1.bf16.msra.mxu0 0
        %572 = vmatprep.subr.bf16.mxu0 0
        %573 = vmatpush1.bf16.msra.mxu0 0
        %574 = vmatprep.subr.bf16.mxu0 0
        %575 = vmatpush1.bf16.msra.mxu0 0
        %576 = vmatprep.subr.bf16.mxu0 0
        %577 = vmatpush1.bf16.msra.mxu0 0
        %578 = vmatprep.subr.bf16.mxu0 0
        %579 = vmatpush1.bf16.msra.mxu0 0
        %580 = vmatprep.subr.bf16.mxu0 0
        %581 = vmatpush1.bf16.msra.mxu0 0
        %582 = vmatprep.subr.bf16.mxu0 0
        %583 = vmatpush1.bf16.msra.mxu0 0
        %584 = vmatprep.subr.bf16.mxu0 0
        %585 = vmatpush1.bf16.msra.mxu0 0
        %586 = vmatprep.mubr.bf16.mxu0 0
        %587 = vmatmul.mubr.bf16.gmra.mrb[0].mxu0 %v549
        %v588 = vpop.f32.mrb[0].mxu0
        %v589 = vadd.f32 %v537, %v588
        %v590 = vpop.f32.mrb[0].mxu0
        %v591 = vpop.f32.mrb[0].mxu0
        %v592 = vadd.f32 %v540, %v591
        %v593 = vpop.f32.mrb[0].mxu0
        %594 = vdwg.mxu0
        %v595 = vld [vmem:[%s445] sm:$0xf]
        %v596 = vld [vmem:[%s445 + $0x4] sm:$0xf]
        %v597 = vld [vmem:[%s7] sm:$0xf]
        %v600 = vunpack.c.l.b16 %v595
        %v601 = vunpack.c.l.b16 %v596
        %v602 = vpack.c.b16 %v601, %v600
        %vm603 = vcmask 64512
        %v605 = vsel %vm603, %v602, 0
        %vm607 = vcmask 1043456
        %v609 = vsel %vm607, %v597, 0
        %611 = vmatprep.subr.bf16.mxu0 0
        %612 = vmatpush1.bf16.msra.mxu0 %v609
        %613 = vmatprep.subr.bf16.mxu0 0
        %614 = vmatpush1.bf16.msra.mxu0 0
        %615 = vmatprep.subr.bf16.mxu0 0
        %616 = vmatpush1.bf16.msra.mxu0 0
        %617 = vmatprep.subr.bf16.mxu0 0
        %618 = vmatpush1.bf16.msra.mxu0 0
        %619 = vmatprep.subr.bf16.mxu0 0
        %620 = vmatpush1.bf16.msra.mxu0 0
        %621 = vmatprep.subr.bf16.mxu0 0
        %622 = vmatpush1.bf16.msra.mxu0 0
        %623 = vmatprep.subr.bf16.mxu0 0
        %624 = vmatpush1.bf16.msra.mxu0 0
        %625 = vmatprep.subr.bf16.mxu0 0
        %626 = vmatpush1.bf16.msra.mxu0 0
        %627 = vmatprep.subr.bf16.mxu0 0
        %628 = vmatpush1.bf16.msra.mxu0 0
        %629 = vmatprep.subr.bf16.mxu0 0
        %630 = vmatpush1.bf16.msra.mxu0 0
        %631 = vmatprep.subr.bf16.mxu0 0
        %632 = vmatpush1.bf16.msra.mxu0 0
        %633 = vmatprep.subr.bf16.mxu0 0
        %634 = vmatpush1.bf16.msra.mxu0 0
        %635 = vmatprep.subr.bf16.mxu0 0
        %636 = vmatpush1.bf16.msra.mxu0 0
        %637 = vmatprep.subr.bf16.mxu0 0
        %638 = vmatpush1.bf16.msra.mxu0 0
        %639 = vmatprep.subr.bf16.mxu0 0
        %640 = vmatpush1.bf16.msra.mxu0 0
        %641 = vmatprep.subr.bf16.mxu0 0
        %642 = vmatpush1.bf16.msra.mxu0 0
        %643 = vmatprep.mubr.bf16.mxu0 0
        %644 = vmatmul.mubr.bf16.gmra.mrb[0].mxu0 %v605
        %v645 = vpop.f32.mrb[0].mxu0
        %v646 = vadd.f32 0.0, %v645
        %v647 = vpop.f32.mrb[0].mxu0
        %v648 = vpop.f32.mrb[0].mxu0
        %v649 = vadd.f32 0.0, %v648
        %v650 = vpop.f32.mrb[0].mxu0
        %651 = vdwg.mxu0
        %v652 = vadd.f32 %v589, %v646
        %v653 = vadd.f32 %v592, %v649
        %v654 = vld [vmem:[%s8] sm:$0x1]
        %v656 = vlaneseq
        %v657 = vshrl.u32 %v656, 7
        %v658 = vsub.s32 0, %v657
        %v659 = vrot.slane %v654, %v658
        %v661 = vadd.f32 %v652, %v659
        %v662 = vadd.f32 %v653, %v659
        %v663 = vmax.f32 %v661, 0.0
        %v664 = vmax.f32 %v662, 0.0
        %v665 = vpack.c.bf16 %v664, %v663
        %v666 = vld [vmem:[%s9] sm:$0xf]
        %v667 = vld [vmem:[%s9 + $0x4] sm:$0xf]
        %v668 = vld [vmem:[%s9 + $0x8] sm:$0xf]
        %v669 = vld [vmem:[%s9 + $0xc] sm:$0xf]
        %v670 = vld [vmem:[%s10] sm:$0x1]
        %v672 = vlaneseq
        %v673 = vshrl.u32 %v672, 7
        %v674 = vsub.s32 0, %v673
        %v675 = vrot.slane %v670, %v674
        %v681 = vunpack.c.l.b16 %v666
        %v682 = vunpack.c.l.b16 %v667
        %v683 = vunpack.c.l.b16 %v668
        %v684 = vunpack.c.l.b16 %v669
        %v685 = vpack.c.b16 %v682, %v681
        %v686 = vpack.c.b16 %v684, %v683
        %vm689 = vcmask 261120
        %v691 = vsel %vm689, %v665, 0
        %693 = vmatprep.subr.bf16.mxu0 0
        %694 = vmatpush1.bf16.msra.mxu0 %v685
        %695 = vmatprep.subr.bf16.mxu0 0
        %696 = vmatpush1.bf16.msra.mxu0 %v686
        %697 = vmatprep.subr.bf16.mxu0 0
        %698 = vmatpush1.bf16.msra.mxu0 0
        %699 = vmatprep.subr.bf16.mxu0 0
        %700 = vmatpush1.bf16.msra.mxu0 0
        %701 = vmatprep.subr.bf16.mxu0 0
        %702 = vmatpush1.bf16.msra.mxu0 0
        %703 = vmatprep.subr.bf16.mxu0 0
        %704 = vmatpush1.bf16.msra.mxu0 0
        %705 = vmatprep.subr.bf16.mxu0 0
        %706 = vmatpush1.bf16.msra.mxu0 0
        %707 = vmatprep.subr.bf16.mxu0 0
        %708 = vmatpush1.bf16.msra.mxu0 0
        %709 = vmatprep.subr.bf16.mxu0 0
        %710 = vmatpush1.bf16.msra.mxu0 0
        %711 = vmatprep.subr.bf16.mxu0 0
        %712 = vmatpush1.bf16.msra.mxu0 0
        %713 = vmatprep.subr.bf16.mxu0 0
        %714 = vmatpush1.bf16.msra.mxu0 0
        %715 = vmatprep.subr.bf16.mxu0 0
        %716 = vmatpush1.bf16.msra.mxu0 0
        %717 = vmatprep.subr.bf16.mxu0 0
        %718 = vmatpush1.bf16.msra.mxu0 0
        %719 = vmatprep.subr.bf16.mxu0 0
        %720 = vmatpush1.bf16.msra.mxu0 0
        %721 = vmatprep.subr.bf16.mxu0 0
        %722 = vmatpush1.bf16.msra.mxu0 0
        %723 = vmatprep.subr.bf16.mxu0 0
        %724 = vmatpush1.bf16.msra.mxu0 0
        %725 = vmatprep.mubr.bf16.mxu0 0
        %726 = vmatmul.mubr.bf16.gmra.mrb[0].mxu0 %v691
        %v727 = vpop.f32.mrb[0].mxu0
        %v728 = vadd.f32 %v675, %v727
        %v729 = vpop.f32.mrb[0].mxu0
        %v730 = vpop.f32.mrb[0].mxu0
        %v731 = vadd.f32 %v675, %v730
        %v732 = vpop.f32.mrb[0].mxu0
        %733 = vdwg.mxu0
        %v734 = vlaneseq
        %v735 = vand.u32 %v734, 127
        %v736 = vld [vmem:[%s439] sm:$0xff]
        %v737 = vld [vmem:[%s439 + $0x8] sm:$0xff]
        %738 = vset.pattern.permute.xlu0 0
        %739 = vperm.xlu0 %738, %v736
        %v740 = vpop.permute.xlu0 %739
        %741 = vset.pattern.permute.xlu0 0
        %742 = vperm.xlu0 %741, %v737
        %v743 = vpop.permute.xlu0 %742
        %vm744 = vcmp.eq.s32.totalorder %v740, %v735
        %vm745 = vcmp.eq.s32.totalorder %v743, %v735
        %v746 = vsel %vm744, 1, 0
        %v747 = vsel %vm745, 1, 0
        %v748 = vcvt.s32.f32 %v746
        %v749 = vcvt.s32.f32 %v747
        %v750 = vld [vmem:[#allocation9] sm:$0xff]
        %v751 = vld [vmem:[#allocation9 + $0x8] sm:$0xff]
        %752 = vxpose.xlu0.b32.start [1/16] %v748, 128
        %753 = vxpose.xlu0.b32.cont [2/16] %v749, 128
        %754 = vxpose.xlu0.b32.cont [3/16] 0.0, 128
        %755 = vxpose.xlu0.b32.cont [4/16] 0.0, 128
        %756 = vxpose.xlu0.b32.cont [5/16] 0.0, 128
        %757 = vxpose.xlu0.b32.cont [6/16] 0.0, 128
        %758 = vxpose.xlu0.b32.cont [7/16] 0.0, 128
        %759 = vxpose.xlu0.b32.cont [8/16] 0.0, 128
        %760 = vxpose.xlu0.b32.cont [9/16] 0.0, 128
        %761 = vxpose.xlu0.b32.cont [10/16] 0.0, 128
        %762 = vxpose.xlu0.b32.cont [11/16] 0.0, 128
        %763 = vxpose.xlu0.b32.cont [12/16] 0.0, 128
        %764 = vxpose.xlu0.b32.cont [13/16] 0.0, 128
        %765 = vxpose.xlu0.b32.cont [14/16] 0.0, 128
        %766 = vxpose.xlu0.b32.cont [15/16] 0.0, 128
        %767 = vxpose.xlu0.b32.end [16/16] 0.0, 128
        %v768 = vpop.trf.xlu0
        %v769 = vpop.trf.xlu0
        %v770 = vpop.trf.xlu0
        %v771 = vpop.trf.xlu0
        %v772 = vpop.trf.xlu0
        %v773 = vpop.trf.xlu0
        %v774 = vpop.trf.xlu0
        %v775 = vpop.trf.xlu0
        %v776 = vpop.trf.xlu0
        %v777 = vpop.trf.xlu0
        %v778 = vpop.trf.xlu0
        %v779 = vpop.trf.xlu0
        %v780 = vpop.trf.xlu0
        %v781 = vpop.trf.xlu0
        %v782 = vpop.trf.xlu0
        %v783 = vpop.trf.xlu0
        %vm784 = vcmask 130048
        %v786 = vsel %vm784, %v768, 0
        %v789 = vsel %vm784, %v769, 0
        %791 = vmatprep.subr.mxu0 0.0
        %792 = vmatpush1.msra.mxu0 %v728
        %793 = vmatprep.subr.mxu0 0.0
        %794 = vmatpush1.msra.mxu0 %v731
        %795 = vmatprep.subr.mxu0 0.0
        %796 = vmatpush1.msra.mxu0 0.0
        %797 = vmatprep.subr.mxu0 0.0
        %798 = vmatpush1.msra.mxu0 0.0
        %799 = vmatprep.subr.mxu0 0.0
        %800 = vmatpush1.msra.mxu0 0.0
        %801 = vmatprep.subr.mxu0 0.0
        %802 = vmatpush1.msra.mxu0 0.0
        %803 = vmatprep.subr.mxu0 0.0
        %804 = vmatpush1.msra.mxu0 0.0
        %805 = vmatprep.subr.mxu0 0.0
        %806 = vmatpush1.msra.mxu0 0.0
        %807 = vmatprep.subr.mxu0 0.0
        %808 = vmatpush1.msra.mxu0 0.0
        %809 = vmatprep.subr.mxu0 0.0
        %810 = vmatpush1.msra.mxu0 0.0
        %811 = vmatprep.subr.mxu0 0.0
        %812 = vmatpush1.msra.mxu0 0.0
        %813 = vmatprep.subr.mxu0 0.0
        %814 = vmatpush1.msra.mxu0 0.0
        %815 = vmatprep.subr.mxu0 0.0
        %816 = vmatpush1.msra.mxu0 0.0
        %817 = vmatprep.subr.mxu0 0.0
        %818 = vmatpush1.msra.mxu0 0.0
        %819 = vmatprep.subr.mxu0 0.0
        %820 = vmatpush1.msra.mxu0 0.0
        %821 = vmatprep.subr.mxu0 0.0
        %822 = vmatpush1.msra.mxu0 0.0
        %823 = vmatprep.subr.mxu0 0.0
        %824 = vmatpush1.msra.mxu0 0.0
        %825 = vmatprep.subr.mxu0 0.0
        %826 = vmatpush1.msra.mxu0 0.0
        %827 = vmatprep.subr.mxu0 0.0
        %828 = vmatpush1.msra.mxu0 0.0
        %829 = vmatprep.subr.mxu0 0.0
        %830 = vmatpush1.msra.mxu0 0.0
        %831 = vmatprep.subr.mxu0 0.0
        %832 = vmatpush1.msra.mxu0 0.0
        %833 = vmatprep.subr.mxu0 0.0
        %834 = vmatpush1.msra.mxu0 0.0
        %835 = vmatprep.subr.mxu0 0.0
        %836 = vmatpush1.msra.mxu0 0.0
        %837 = vmatprep.subr.mxu0 0.0
        %838 = vmatpush1.msra.mxu0 0.0
        %839 = vmatprep.subr.mxu0 0.0
        %840 = vmatpush1.msra.mxu0 0.0
        %841 = vmatprep.subr.mxu0 0.0
        %842 = vmatpush1.msra.mxu0 0.0
        %843 = vmatprep.subr.mxu0 0.0
        %844 = vmatpush1.msra.mxu0 0.0
        %845 = vmatprep.subr.mxu0 0.0
        %846 = vmatpush1.msra.mxu0 0.0
        %847 = vmatprep.subr.mxu0 0.0
        %848 = vmatpush1.msra.mxu0 0.0
        %849 = vmatprep.subr.mxu0 0.0
        %850 = vmatpush1.msra.mxu0 0.0
        %851 = vmatprep.subr.mxu0 0.0
        %852 = vmatpush1.msra.mxu0 0.0
        %853 = vmatprep.subr.mxu0 0.0
        %854 = vmatpush1.msra.mxu0 0.0
        %855 = vmatprep.mubr.f32.mxu0 0.0
        %856 = vmatmul.mubr.f32.gmra.mrb[0].mxu0 %v786
        %v857 = vpop.f32.mrb[0].mxu0
        %v858 = vadd.f32 0.0, %v857
        %v859 = vpop.f32.mrb[0].mxu0
        %860 = vmatprep.mubr.f32.mxu0 0.0
        %861 = vmatmul.mubr.f32.gmra.mrb[0].mxu0 %v789
        %v862 = vpop.f32.mrb[0].mxu0
        %v863 = vadd.f32 0.0, %v862
        %v864 = vpop.f32.mrb[0].mxu0
        %865 = vdwg.mxu0
        %v866 = vadd.f32 %v750, %v858
        %v867 = vadd.f32 %v751, %v863
        %868 = vst.msk [vmem:[#allocation9] sm:$0xff] %vm689, %v866
        %869 = vst.msk [vmem:[#allocation9 + $0x8] sm:$0xff] %vm689, %v867
        %v870 = vpack.c.bf16 %v731, %v728
        %v871 = vld [vmem:[%s11] sm:$0xf]
        %v872 = vld [vmem:[%s11 + $0x4] sm:$0xf]
        %v873 = vld [vmem:[%s11 + $0x8] sm:$0xf]
        %v874 = vld [vmem:[%s11 + $0xc] sm:$0xf]
        %v875 = vld [vmem:[%s12] sm:$0x1]
        %v877 = vlaneseq
        %v878 = vshrl.u32 %v877, 7
        %v879 = vsub.s32 0, %v878
        %v880 = vrot.slane %v875, %v879
        %v886 = vunpack.c.l.b16 %v871
        %v887 = vunpack.c.l.b16 %v872
        %v888 = vunpack.c.l.b16 %v873
        %v889 = vunpack.c.l.b16 %v874
        %v890 = vpack.c.b16 %v887, %v886
        %v891 = vpack.c.b16 %v889, %v888
        %v895 = vsel %vm689, %v870, 0
        %897 = vmatprep.subr.bf16.mxu0 0
        %898 = vmatpush1.bf16.msra.mxu0 %v890
        %899 = vmatprep.subr.bf16.mxu0 0
        %900 = vmatpush1.bf16.msra.mxu0 %v891
        %901 = vmatprep.subr.bf16.mxu0 0
        %902 = vmatpush1.bf16.msra.mxu0 0
        %903 = vmatprep.subr.bf16.mxu0 0
        %904 = vmatpush1.bf16.msra.mxu0 0
        %905 = vmatprep.subr.bf16.mxu0 0
        %906 = vmatpush1.bf16.msra.mxu0 0
        %907 = vmatprep.subr.bf16.mxu0 0
        %908 = vmatpush1.bf16.msra.mxu0 0
        %909 = vmatprep.subr.bf16.mxu0 0
        %910 = vmatpush1.bf16.msra.mxu0 0
        %911 = vmatprep.subr.bf16.mxu0 0
        %912 = vmatpush1.bf16.msra.mxu0 0
        %913 = vmatprep.subr.bf16.mxu0 0
        %914 = vmatpush1.bf16.msra.mxu0 0
        %915 = vmatprep.subr.bf16.mxu0 0
        %916 = vmatpush1.bf16.msra.mxu0 0
        %917 = vmatprep.subr.bf16.mxu0 0
        %918 = vmatpush1.bf16.msra.mxu0 0
        %919 = vmatprep.subr.bf16.mxu0 0
        %920 = vmatpush1.bf16.msra.mxu0 0
        %921 = vmatprep.subr.bf16.mxu0 0
        %922 = vmatpush1.bf16.msra.mxu0 0
        %923 = vmatprep.subr.bf16.mxu0 0
        %924 = vmatpush1.bf16.msra.mxu0 0
        %925 = vmatprep.subr.bf16.mxu0 0
        %926 = vmatpush1.bf16.msra.mxu0 0
        %927 = vmatprep.subr.bf16.mxu0 0
        %928 = vmatpush1.bf16.msra.mxu0 0
        %929 = vmatprep.mubr.bf16.mxu0 0
        %930 = vmatmul.mubr.bf16.gmra.mrb[0].mxu0 %v895
        %v931 = vpop.f32.mrb[0].mxu0
        %v932 = vadd.f32 %v880, %v931
        %v933 = vpop.f32.mrb[0].mxu0
        %v934 = vpop.f32.mrb[0].mxu0
        %v935 = vadd.f32 %v880, %v934
        %v936 = vpop.f32.mrb[0].mxu0
        %937 = vdwg.mxu0
        %v938 = vpack.c.bf16 %v935, %v932
        %v940 = vunpack.c.l.b16 %v938
        %v941 = vunpack.c.h.b16 %v938
        %v942 = vpack.c.b16 %v940, %v940
        %v943 = vpack.c.b16 %v941, %v941
        %946 = vst [vmem:[%s432] sm:$0xf] %v942
        %947 = vst [vmem:[%s432 + $0x4] sm:$0xf] %v943
        %s948 = sand.u32 %s289, 1
        %s949 = scalar_lea.sflag [#allocation8], %s948
        %s950 = sand.u32 %s289, 1
        %s951 = smul.addr %s950, 8
        %s952 = scalar_lea.vmem [#allocation7], %s951
        // Predicated region
        $region76: #{tpu_custom_call.1} parent=63 // pred_check
          %p953 = pneg %p299
        $region77: #{tpu_custom_call.1} parent=63 // pred_check_branch
          %955 = sbr.rel (%p953) target = $region79
        $region78: #{tpu_custom_call.1} parent=63 // pred_region
          %s956 = smul.u32 2, %s40
          %s958 = ssub.s32 128, 128
          %959 = vsyncadd %s949, %s958
          %s960 = smul.addr %s956, 64
          %s961 = scalar_lea.hbm %s13, %s960
          %s962 = sshll.u32 %s952, 4
          %s963 = int_to_ptr.vmem [resolvable:$true] %s962
          %968 = dma.vmem_to_hbm [thread:$0]  %s963, 128, %s961, %s949, 64, 64, 4
        $region79: #{tpu_custom_call.1} parent=63 // pred_fallthru
          _
        // Predicated region
        $region80: #{tpu_custom_call.1} parent=63 // pred_check
          %p969 = pneg %p320
        $region81: #{tpu_custom_call.1} parent=63 // pred_check_branch
          %971 = sbr.rel (%p969) target = $region83
        $region82: #{tpu_custom_call.1} parent=63 // pred_region
          %s973 = ssub.s32 256, 256
          %974 = vsyncadd [#allocation10], %s973
          %s975 = sshll.u32 [#allocation9], 4
          %s976 = int_to_ptr.vmem [resolvable:$true] %s975
          %981 = dma.vmem_to_hbm [thread:$0]  %s976, 256, %s14, [#allocation10], 128, 128, 8
        $region83: #{tpu_custom_call.1} parent=63 // pred_fallthru
          _
        // Predicated region
        $region84: #{tpu_custom_call.1} parent=63 // pred_check
          %p982 = pneg %p320
        $region85: #{tpu_custom_call.1} parent=63 // pred_check_branch
          %984 = sbr.rel (%p982) target = $region87
        $region86: #{tpu_custom_call.1} parent=63 // pred_region
          %985 = dma.done [#allocation10], 256
        $region87: #{tpu_custom_call.1} parent=63 // pred_fallthru
          _
      $region64: #{tpu_custom_call.1} parent=5 // pred_fallthru
        _
      %p986 = scmp.le.s32.totalorder 2, %s35
      // Predicated region
      $region88: #{tpu_custom_call.1} parent=5 // pred_check
        %p987 = pneg %p986
      $region89: #{tpu_custom_call.1} parent=5 // pred_check_branch
        %989 = sbr.rel (%p987) target = $region91
      $region90: #{tpu_custom_call.1} parent=5 // pred_region
        %s990 = ssub.s32 %s35, 2
        // Predicated region
        $region92: #{tpu_custom_call.1} parent=90 // pred_check
          %p991 = pneg %p305
        $region93: #{tpu_custom_call.1} parent=90 // pred_check_branch
          %993 = sbr.rel (%p991) target = $region95
        $region94: #{tpu_custom_call.1} parent=90 // pred_region
          %s994 = sand.u32 %s290, 1
          %s995 = scalar_lea.sflag [#allocation8], %s994
          %s996 = sand.u32 %s290, 1
          %s997 = smul.addr %s996, 8
          %s998 = scalar_lea.vmem [#allocation7], %s997
          %999 = dma.done %s995, 128
        $region95: #{tpu_custom_call.1} parent=90 // pred_fallthru
          _
      $region91: #{tpu_custom_call.1} parent=5 // pred_fallthru
        _
    $region6: #{tpu_custom_call.1} parent=1 // loop_footer
      %s39 = sadd.s32 1, %s35
    $region7: #{tpu_custom_call.1} parent=1 // loop_footer_branch
      %34 = sbr.rel target = $region3
    $region8: #{tpu_custom_call.1} parent=1 // loop_exit
      _
    %1000 = vsyncpa [#allocation8], 1
    %s1001 = scalar_lea.sflag [#allocation8], 1
    %1002 = vsyncpa %s1001, 1
    %1003 = vsyncpa [#allocation10], 1

</llo_original>
